<compile_context>
chip_gen: v6e
topology: v6e:2x2x1
jax: 0.10.0
libtpu: 0.0.40
codegen_flags: <defaults>
</compile_context>

<pallas_src>
import functools

import numpy as np
import jax
import jax.numpy as jnp
from jax.experimental import pallas as pl
from jax.experimental.pallas import tpu as pltpu


# ----------------------------------------------------------------------------
# Pallas kernel: everything after token selection.
# ----------------------------------------------------------------------------
def _texual_kernel(feat_ref, pmask_ref, wlin_ref, blin_ref, w1_ref, b1_ref,
                   gamma_ref, beta_ref, w2_ref, b2_ref, out_ref,
                   *, bs, n_pad, n_valid, embed_dim):
    # --- l2norm over feature dim; single EUP rsqrt ------------------------
    # eps placement differs slightly from 1/(sqrt(ss)+1e-8); padded zero rows
    # still map exactly to 0 (x == 0).
    x = feat_ref[...]                                          # (M, D) f32
    ss = jnp.sum(x * x, axis=-1, keepdims=True)
    xn = x * jax.lax.rsqrt(ss + 1e-8)
    xb = xn.astype(jnp.bfloat16)                               # ~8 packed vregs, live

    # --- MLP path first: Linear -> BatchNorm1d -> ReLU -> Linear ----------
    h = jnp.dot(xb, w1_ref[...],
                preferred_element_type=jnp.float32) + b1_ref[...]   # (M, H)

    # Batch statistics over the *valid* rows only (padding rows excluded with
    # a static mask; every sample contributes exactly n_valid rows).
    m_rows = bs * n_pad
    row = jax.lax.broadcasted_iota(jnp.int32, (m_rows, 1), 0)
    within = jnp.bitwise_and(row, n_pad - 1)                   # n_pad is a power of two
    bn_mask = jnp.where(within < n_valid, 1.0, 0.0)            # (M, 1) f32, static
    inv_cnt = 1.0 / float(bs * n_valid)
    mu = jnp.sum(h * bn_mask, axis=0, keepdims=True) * inv_cnt
    diff = (h - mu) * bn_mask
    var = jnp.sum(diff * diff, axis=0, keepdims=True) * inv_cnt  # biased var (PyTorch BN)
    hn = (h - mu) * jax.lax.rsqrt(var + 1e-5) * gamma_ref[...] + beta_ref[...]
    hr = jnp.maximum(hn, 0.0)

    y = jnp.dot(hr.astype(jnp.bfloat16), w2_ref[...],
                preferred_element_type=jnp.float32) + b2_ref[...]   # (M, E)

    # --- cap branch issued only now (keeps its 32-vreg result out of the BN
    # live range) + residual add -------------------------------------------
    cap = jnp.dot(xb, wlin_ref[...],
                  preferred_element_type=jnp.float32) + blin_ref[...]
    y = y + cap                                                 # (M, E) f32

    # --- maxk_pool1d_var (k=1): vectorized masked max over rows ------------
    # pmask has >= 1 valid row per sample (lengths clamped in wrapper), so no
    # -inf survives the reduction.  n_pad = 16 rows = 2 f32 sublane tiles per
    # sample -> the reshape is tile aligned (free).
    masked = jnp.where(pmask_ref[...] > 0.0, y, -jnp.inf)
    out_ref[...] = jnp.max(masked.reshape(bs, n_pad, embed_dim), axis=1)


def prepare_params(params):
    """Pre-cast matmul weights to bf16 (MXU feed); biases/BN params stay f32."""
    return {
        "wlin": params["wlin"].astype(jnp.bfloat16),
        "blin": params["blin"].astype(jnp.float32),
        "w1": params["w1"].astype(jnp.bfloat16),
        "b1": params["b1"].astype(jnp.float32),
        "gamma": params["gamma"].astype(jnp.float32),
        "beta": params["beta"].astype(jnp.float32),
        "w2": params["w2"].astype(jnp.bfloat16),
        "b2": params["b2"].astype(jnp.float32),
    }


# ----------------------------------------------------------------------------
# Device-side glue: data-dependent token selection (jnp, fused into the same
# jit as the Pallas call).  Net effect of the reference's two-stage sort is
# "top-k by attention over word positions 1..token_len-1, descending", which
# lax.top_k computes when >= k valid words exist (the <k / padded corner is
# undefined/OOB in the reference itself).
# ----------------------------------------------------------------------------
def select_top_tokens_device(emb, ids, att, *, n_sel, n_pad, ratio):
    bs, L, _ = emb.shape
    is_zero = (ids == 0)
    has_zero = jnp.any(is_zero, axis=1)
    first_zero = jnp.argmax(is_zero, axis=1).astype(jnp.int32)
    tl = jnp.where(has_zero, first_zero, L).astype(jnp.int32)     # account_len
    tl = jnp.minimum(tl, 76)

    att_row = jnp.take_along_axis(att, tl[:, None, None], axis=1)[:, 0, :]  # (bs, L)
    pos = jnp.arange(L)[None, :]
    valid = (pos >= 1) & (pos < tl[:, None])
    neg = jnp.finfo(att.dtype).min
    masked_att = jnp.where(valid, att_row, neg)
    _, top_idx = jax.lax.top_k(masked_att, n_sel)                 # descending attention
    sel = jnp.take_along_axis(emb, top_idx[:, :, None], axis=1)   # (bs, n_sel, D)
    sel_pad = jnp.pad(sel, ((0, 0), (0, n_pad - n_sel), (0, 0)))  # tile-align rows

    counts = jnp.sum((ids != 0).astype(jnp.int32), axis=1)
    k = int((L - 2) * ratio)
    lengths = jnp.minimum(counts - 2, k).astype(jnp.int32)
    return sel_pad, lengths


# ----------------------------------------------------------------------------
# Single jitted forward: selection + glue + Pallas kernel (one dispatch).
# ----------------------------------------------------------------------------
def texual_forward(emb, ids, att, prep, *, n_sel, n_pad, ratio):
    sel_pad, lengths = select_top_tokens_device(
        emb, ids, att, n_sel=n_sel, n_pad=n_pad, ratio=ratio)
    bs, npd, d = sel_pad.shape
    e = prep["wlin"].shape[1]
    h_dim = prep["w1"].shape[1]

    # Lane/sublane alignment + grid-less VMEM guards (v7x: 64 MiB physical).
    assert npd == n_pad and (n_pad & (n_pad - 1)) == 0, "n_pad must be a power of two"
    assert d % 128 == 0 and e % 128 == 0 and h_dim % 128 == 0, \
        "D, H, E must be multiples of 128 (lane-aligned slices / MXU feed)"
    assert (bs * n_pad) % 8 == 0, "rows must be a multiple of the f32 sublane tile"
    assert bs * n_pad <= 4096, "grid-less design: re-tile for larger batches"

    feat2d = sel_pad.reshape(bs * n_pad, d).astype(jnp.float32)
    lens_c = jnp.clip(lengths, 1, n_sel)                          # >= 1 valid row/sample
    pmask = (jnp.arange(n_pad)[None, :] < lens_c[:, None]).astype(jnp.float32)
    pmask = pmask.reshape(bs * n_pad, 1)

    kern = functools.partial(_texual_kernel, bs=bs, n_pad=n_pad,
                             n_valid=n_sel, embed_dim=e)
    return pl.pallas_call(
        kern,
        out_shape=jax.ShapeDtypeStruct((bs, e), jnp.float32),
        in_specs=[pl.BlockSpec(memory_space=pltpu.MemorySpace.VMEM)] * 10,
        out_specs=pl.BlockSpec(memory_space=pltpu.MemorySpace.VMEM),
        compiler_params=pltpu.CompilerParams(vmem_limit_bytes=32 * 1024 * 1024),
    )(feat2d, pmask, prep["wlin"], prep["blin"], prep["w1"], prep["b1"],
      prep["gamma"], prep["beta"], prep["w2"], prep["b2"])


# ----------------------------------------------------------------------------
# Pure numpy reference of the post-selection math (original f32/fp16 semantics)
# for a silent sanity check.
# ----------------------------------------------------------------------------
def reference_forward(sel, lengths, p):
    bs, n, d = sel.shape
    x = sel.reshape(bs * n, d).astype(np.float32)
    norm = np.sqrt((x * x).sum(-1, keepdims=True)) + 1e-8
    xn = x / norm
    x16 = xn.astype(np.float16).astype(np.float32)
    cap = x16 @ np.asarray(p["wlin"]) + np.asarray(p["blin"])
    cap = cap.astype(np.float16).astype(np.float32)
    h = xn @ np.asarray(p["w1"]) + np.asarray(p["b1"])
    mu = h.mean(0, keepdims=True)
    var = ((h - mu) ** 2).mean(0, keepdims=True)
    hn = (h - mu) / np.sqrt(var + 1e-5) * np.asarray(p["gamma"]) + np.asarray(p["beta"])
    y = np.maximum(hn, 0.0) @ np.asarray(p["w2"]) + np.asarray(p["b2"]) + cap
    y3 = y.reshape(bs, n, -1)
    out = np.stack(
        [y3[b, :max(1, min(int(lengths[b]), n))].max(0) for b in range(bs)], 0)
    return out.astype(np.float32)


# ----------------------------------------------------------------------------
if __name__ == "__main__":
    bs, L, D, E = 8, 16, 128, 256      # small shapes: input_dim=128, embed_dim=256, seq=16
    H = E // 2
    N_SEL, N_PAD = 10, 16              # round(0.4*25)=10 selected tokens, padded to 16 rows
    RATIO = 0.4

    key = jax.random.PRNGKey(0)
    ks = jax.random.split(key, 10)

    # Deterministic caption ids: BOS + words + zero padding (>= 11 tokens each).
    tok_counts = [13, 12, 15, 11, 14, 16, 12, 13]
    caption_ids_np = np.zeros((bs, L), np.int32)
    for i, c in enumerate(tok_counts):
        caption_ids_np[i, :c] = np.arange(1, c + 1)
    caption_ids = jnp.asarray(caption_ids_np)

    all_word_embeddings = jax.random.normal(ks[0], (bs, L, D), jnp.float32)
    attention_map = jax.random.uniform(ks[1], (bs, L, L), jnp.float32, 0.01, 1.0)

    def lin_init(k, fan_in, shape):
        return (jax.random.normal(k, shape, jnp.float32) / np.sqrt(fan_in)).astype(jnp.float32)

    params = {
        # the reference calls self.linear on .half() input -> pre-round to fp16 precision
        "wlin": lin_init(ks[2], D, (D, E)).astype(jnp.float16).astype(jnp.float32),
        "blin": (0.01 * jax.random.normal(ks[3], (1, E), jnp.float32)
                 ).astype(jnp.float16).astype(jnp.float32),
        "w1": lin_init(ks[4], D, (D, H)),
        "b1": 0.01 * jax.random.normal(ks[5], (1, H), jnp.float32),
        "gamma": 1.0 + 0.1 * jax.random.normal(ks[6], (1, H), jnp.float32),
        "beta": 0.1 * jax.random.normal(ks[7], (1, H), jnp.float32),
        "w2": lin_init(ks[8], H, (H, E)),
        "b2": 0.01 * jax.random.normal(ks[9], (1, E), jnp.float32),
    }
    prep = prepare_params(params)

    forward = jax.jit(functools.partial(texual_forward,
                                        n_sel=N_SEL, n_pad=N_PAD, ratio=RATIO))
    out = forward(all_word_embeddings, caption_ids, attention_map, prep)
    out = jax.block_until_ready(out)

    # Reference check (selection recomputed outside the fused program).
    sel_pad_ref, lengths_ref = select_top_tokens_device(
        all_word_embeddings, caption_ids, attention_map,
        n_sel=N_SEL, n_pad=N_PAD, ratio=RATIO)
    sel_np = np.asarray(sel_pad_ref)[:, :N_SEL, :]
    ref = reference_forward(sel_np, np.asarray(lengths_ref), params)
    assert out.shape == (bs, E) and out.dtype == jnp.float32
    err = float(jnp.max(jnp.abs(out - ref)))
    assert err < 1e-1, f"max abs err {err}"
    print("KERNEL_OK")
</pallas_src>

<mosaic_0001>
module attributes {stable_mosaic.version = 11 : i64} {
  func.func @_texual_kernel(%arg0: memref<128x128xf32, #tpu.memory_space<vmem>>, %arg1: memref<128x1xf32, #tpu.memory_space<vmem>>, %arg2: memref<128x256xbf16, #tpu.memory_space<vmem>>, %arg3: memref<1x256xf32, #tpu.memory_space<vmem>>, %arg4: memref<128x128xbf16, #tpu.memory_space<vmem>>, %arg5: memref<1x128xf32, #tpu.memory_space<vmem>>, %arg6: memref<1x128xf32, #tpu.memory_space<vmem>>, %arg7: memref<1x128xf32, #tpu.memory_space<vmem>>, %arg8: memref<128x256xbf16, #tpu.memory_space<vmem>>, %arg9: memref<1x256xf32, #tpu.memory_space<vmem>>, %arg10: memref<8x256xf32, #tpu.memory_space<vmem>>) attributes {dimension_semantics = [], scalar_prefetch = 0 : i64, scratch_operands = 0 : i64, tpu.core_type = #tpu.core_type<tc>} {
    %c0 = arith.constant 0 : index
    %c0_0 = arith.constant 0 : index
    %0 = vector.load %arg0[%c0, %c0_0] : memref<128x128xf32, #tpu.memory_space<vmem>>, vector<128x128xf32>
    %1 = arith.mulf %0, %0 : vector<128x128xf32>
    %cst = arith.constant dense<0.000000e+00> : vector<128xf32>
    %2 = vector.multi_reduction <add>, %1, %cst [1] : vector<128x128xf32> to vector<128xf32>
    %3 = vector.shape_cast %2 : vector<128xf32> to vector<128x1xf32>
    %cst_1 = arith.constant 9.99999993E-9 : f32
    %4 = vector.broadcast %cst_1 : f32 to vector<128x1xf32>
    %5 = arith.addf %3, %4 : vector<128x1xf32>
    %6 = math.rsqrt %5 : vector<128x1xf32>
    %7 = vector.broadcast %6 : vector<128x1xf32> to vector<128x128xf32>
    %8 = arith.mulf %0, %7 : vector<128x128xf32>
    %9 = arith.truncf %8 : vector<128x128xf32> to vector<128x128xbf16>
    %c0_2 = arith.constant 0 : index
    %c0_3 = arith.constant 0 : index
    %10 = vector.load %arg4[%c0_2, %c0_3] : memref<128x128xbf16, #tpu.memory_space<vmem>>, vector<128x128xbf16>
    %cst_4 = arith.constant dense<0.000000e+00> : vector<128x128xf32>
    %11 = tpu.matmul %9, %10, %cst_4 {dimension_numbers = #tpu.dot_dimension_numbers<[1], [0], [0], [1], [0, 0, 1, 1], [], []>} : vector<128x128xbf16>, vector<128x128xbf16>, vector<128x128xf32> -> vector<128x128xf32>
    %c0_5 = arith.constant 0 : index
    %c0_6 = arith.constant 0 : index
    %12 = vector.load %arg5[%c0_5, %c0_6] : memref<1x128xf32, #tpu.memory_space<vmem>>, vector<1x128xf32>
    %13 = vector.broadcast %12 : vector<1x128xf32> to vector<128x128xf32>
    %14 = arith.addf %11, %13 : vector<128x128xf32>
    %15 = tpu.iota {dimensions = array<i32: 0>} : vector<128x1xi32>
    %c15_i32 = arith.constant 15 : i32
    %16 = vector.broadcast %c15_i32 : i32 to vector<128x1xi32>
    %17 = arith.andi %15, %16 : vector<128x1xi32>
    %c10_i32 = arith.constant 10 : i32
    %18 = vector.broadcast %c10_i32 : i32 to vector<128x1xi32>
    %19 = arith.cmpi slt, %17, %18 : vector<128x1xi32>
    %cst_7 = arith.constant 1.000000e+00 : f32
    %cst_8 = arith.constant 0.000000e+00 : f32
    %20 = vector.broadcast %cst_7 : f32 to vector<128x1xf32>
    %21 = vector.broadcast %cst_8 : f32 to vector<128x1xf32>
    %22 = arith.select %19, %20, %21 : vector<128x1xi1>, vector<128x1xf32>
    %23 = vector.broadcast %22 : vector<128x1xf32> to vector<128x128xf32>
    %24 = arith.mulf %14, %23 : vector<128x128xf32>
    %cst_9 = arith.constant dense<0.000000e+00> : vector<128xf32>
    %25 = vector.multi_reduction <add>, %24, %cst_9 [0] : vector<128x128xf32> to vector<128xf32>
    %26 = vector.shape_cast %25 : vector<128xf32> to vector<1x128xf32>
    %cst_10 = arith.constant 1.250000e-02 : f32
    %27 = vector.broadcast %cst_10 : f32 to vector<1x128xf32>
    %28 = arith.mulf %26, %27 : vector<1x128xf32>
    %29 = vector.broadcast %28 : vector<1x128xf32> to vector<128x128xf32>
    %30 = arith.subf %14, %29 : vector<128x128xf32>
    %31 = vector.broadcast %22 : vector<128x1xf32> to vector<128x128xf32>
    %32 = arith.mulf %30, %31 : vector<128x128xf32>
    %33 = arith.mulf %32, %32 : vector<128x128xf32>
    %cst_11 = arith.constant dense<0.000000e+00> : vector<128xf32>
    %34 = vector.multi_reduction <add>, %33, %cst_11 [0] : vector<128x128xf32> to vector<128xf32>
    %35 = vector.shape_cast %34 : vector<128xf32> to vector<1x128xf32>
    %cst_12 = arith.constant 1.250000e-02 : f32
    %36 = vector.broadcast %cst_12 : f32 to vector<1x128xf32>
    %37 = arith.mulf %35, %36 : vector<1x128xf32>
    %38 = vector.broadcast %28 : vector<1x128xf32> to vector<128x128xf32>
    %39 = arith.subf %14, %38 : vector<128x128xf32>
    %cst_13 = arith.constant 9.99999974E-6 : f32
    %40 = vector.broadcast %cst_13 : f32 to vector<1x128xf32>
    %41 = arith.addf %37, %40 : vector<1x128xf32>
    %42 = math.rsqrt %41 : vector<1x128xf32>
    %43 = vector.broadcast %42 : vector<1x128xf32> to vector<128x128xf32>
    %44 = arith.mulf %39, %43 : vector<128x128xf32>
    %c0_14 = arith.constant 0 : index
    %c0_15 = arith.constant 0 : index
    %45 = vector.load %arg6[%c0_14, %c0_15] : memref<1x128xf32, #tpu.memory_space<vmem>>, vector<1x128xf32>
    %46 = vector.broadcast %45 : vector<1x128xf32> to vector<128x128xf32>
    %47 = arith.mulf %44, %46 : vector<128x128xf32>
    %c0_16 = arith.constant 0 : index
    %c0_17 = arith.constant 0 : index
    %48 = vector.load %arg7[%c0_16, %c0_17] : memref<1x128xf32, #tpu.memory_space<vmem>>, vector<1x128xf32>
    %49 = vector.broadcast %48 : vector<1x128xf32> to vector<128x128xf32>
    %50 = arith.addf %47, %49 : vector<128x128xf32>
    %cst_18 = arith.constant 0.000000e+00 : f32
    %51 = vector.broadcast %cst_18 : f32 to vector<128x128xf32>
    %52 = arith.maximumf %50, %51 : vector<128x128xf32>
    %53 = arith.truncf %52 : vector<128x128xf32> to vector<128x128xbf16>
    %c0_19 = arith.constant 0 : index
    %c0_20 = arith.constant 0 : index
    %54 = vector.load %arg8[%c0_19, %c0_20] : memref<128x256xbf16, #tpu.memory_space<vmem>>, vector<128x256xbf16>
    %cst_21 = arith.constant dense<0.000000e+00> : vector<128x256xf32>
    %55 = tpu.matmul %53, %54, %cst_21 {dimension_numbers = #tpu.dot_dimension_numbers<[1], [0], [0], [1], [0, 0, 1, 1], [], []>} : vector<128x128xbf16>, vector<128x256xbf16>, vector<128x256xf32> -> vector<128x256xf32>
    %c0_22 = arith.constant 0 : index
    %c0_23 = arith.constant 0 : index
    %56 = vector.load %arg9[%c0_22, %c0_23] : memref<1x256xf32, #tpu.memory_space<vmem>>, vector<1x256xf32>
    %57 = vector.broadcast %56 : vector<1x256xf32> to vector<128x256xf32>
    %58 = arith.addf %55, %57 : vector<128x256xf32>
    %c0_24 = arith.constant 0 : index
    %c0_25 = arith.constant 0 : index
    %59 = vector.load %arg2[%c0_24, %c0_25] : memref<128x256xbf16, #tpu.memory_space<vmem>>, vector<128x256xbf16>
    %cst_26 = arith.constant dense<0.000000e+00> : vector<128x256xf32>
    %60 = tpu.matmul %9, %59, %cst_26 {dimension_numbers = #tpu.dot_dimension_numbers<[1], [0], [0], [1], [0, 0, 1, 1], [], []>} : vector<128x128xbf16>, vector<128x256xbf16>, vector<128x256xf32> -> vector<128x256xf32>
    %c0_27 = arith.constant 0 : index
    %c0_28 = arith.constant 0 : index
    %61 = vector.load %arg3[%c0_27, %c0_28] : memref<1x256xf32, #tpu.memory_space<vmem>>, vector<1x256xf32>
    %62 = vector.broadcast %61 : vector<1x256xf32> to vector<128x256xf32>
    %63 = arith.addf %60, %62 : vector<128x256xf32>
    %64 = arith.addf %58, %63 : vector<128x256xf32>
    %c0_29 = arith.constant 0 : index
    %c0_30 = arith.constant 0 : index
    %65 = vector.load %arg1[%c0_29, %c0_30] : memref<128x1xf32, #tpu.memory_space<vmem>>, vector<128x1xf32>
    %cst_31 = arith.constant 0.000000e+00 : f32
    %66 = vector.broadcast %cst_31 : f32 to vector<128x1xf32>
    %67 = arith.cmpf ogt, %65, %66 : vector<128x1xf32>
    %cst_32 = arith.constant 0xFF800000 : f32
    %68 = vector.shape_cast %67 : vector<128x1xi1> to vector<128x1xi1>
    %69 = vector.broadcast %68 : vector<128x1xi1> to vector<128x256xi1>
    %70 = vector.broadcast %cst_32 : f32 to vector<128x256xf32>
    %71 = arith.select %69, %64, %70 : vector<128x256xi1>, vector<128x256xf32>
    %72 = vector.shape_cast %71 : vector<128x256xf32> to vector<8x16x256xf32>
    %cst_33 = arith.constant dense<0xFF800000> : vector<8x256xf32>
    %73 = vector.multi_reduction <maximumf>, %72, %cst_33 [1] : vector<8x16x256xf32> to vector<8x256xf32>
    %c0_34 = arith.constant 0 : index
    %c0_35 = arith.constant 0 : index
    %74 = vector.load %arg10[%c0_34, %c0_35] : memref<8x256xf32, #tpu.memory_space<vmem>>, vector<8x256xf32>
    tpu.vector_store %arg10[%c0_34, %c0_35], %73 {strides = array<i32>} : memref<8x256xf32, #tpu.memory_space<vmem>>, vector<8x256xf32>,
    return
  }
}

</mosaic_0001>

<llo_original>
// kernel: texual_forward.1
$region0: #{texual_forward.1}
  #allocation0 [shape = 'u32[]', space=smem, size = 0x4, offset = 0x4, fixed_abs, tag = 'smem constant byte address 0x4 - core index']
  #allocation1 [shape = 'u32[144,128]{1,0:T(1,128)}', space=vmem, size = 0x12000, scoped, tag = 'internal scratch']
  %s0 = inlined_call_operand.vmem [shape: f32[128,128], index: 0, kind: input, shape index: {}]
  %s1 = inlined_call_operand.vmem [shape: f32[128,1], index: 1, kind: input, shape index: {}]
  %s2 = inlined_call_operand.vmem [shape: bf16[128,256], index: 2, kind: input, shape index: {}]
  %s3 = inlined_call_operand.vmem [shape: f32[1,256], index: 3, kind: input, shape index: {}]
  %s4 = inlined_call_operand.vmem [shape: bf16[128,128], index: 4, kind: input, shape index: {}]
  %s5 = inlined_call_operand.vmem [shape: f32[1,128], index: 5, kind: input, shape index: {}]
  %s6 = inlined_call_operand.vmem [shape: f32[1,128], index: 6, kind: input, shape index: {}]
  %s7 = inlined_call_operand.vmem [shape: f32[1,128], index: 7, kind: input, shape index: {}]
  %s8 = inlined_call_operand.vmem [shape: bf16[128,256], index: 8, kind: input, shape index: {}]
  %s9 = inlined_call_operand.vmem [shape: f32[1,256], index: 9, kind: input, shape index: {}]
  %s10 = inlined_call_operand.hbm [shape: f32[8,256], index: 10, kind: output, shape index: {}]
  %s11 = sld [smem:[#allocation0]]
  $region50: #{texual_forward.1} parent=0
    _
  %s13 = ssub.s32 1, %s11
  %s14 = scalar_select 0, %s13, %s11
  $region1: #{texual_forward.1} parent=0
    #allocation2 [shape = 'u8[8192]{0}', space=vmem, size = 0x2000, scoped, tag = 'output window, operand 0, single buffered']
    #allocation3 [shape = 's32[1]{0}', space=sflag, size = 0x4, scoped, tag = 'scoped memory for texual_forward.1']
    %15 = vsyncpa [#allocation3], 0
    // Predicated region
    $region2: #{texual_forward.1} parent=1 // pred_check
      _
    $region3: #{texual_forward.1} parent=1 // pred_check_branch
      %17 = sbr.rel (0) target = $region5
    $region4: #{texual_forward.1} parent=1 // pred_region
      _
    $region5: #{texual_forward.1} parent=1 // pred_fallthru
      _
    // Predicated region
    $region6: #{texual_forward.1} parent=1 // pred_check
      _
    $region7: #{texual_forward.1} parent=1 // pred_check_branch
      %19 = sbr.rel (0) target = $region9
    $region8: #{texual_forward.1} parent=1 // pred_region
      _
    $region9: #{texual_forward.1} parent=1 // pred_fallthru
      _
    // Predicated region
    $region10: #{texual_forward.1} parent=1 // pred_check
      _
    $region11: #{texual_forward.1} parent=1 // pred_check_branch
      %21 = sbr.rel (0) target = $region13
    $region12: #{texual_forward.1} parent=1 // pred_region
      _
    $region13: #{texual_forward.1} parent=1 // pred_fallthru
      _
    // Predicated region
    $region14: #{texual_forward.1} parent=1 // pred_check
      _
    $region15: #{texual_forward.1} parent=1 // pred_check_branch
      %23 = sbr.rel (0) target = $region17
    $region16: #{texual_forward.1} parent=1 // pred_region
      _
    $region17: #{texual_forward.1} parent=1 // pred_fallthru
      _
    // Predicated region
    $region18: #{texual_forward.1} parent=1 // pred_check
      _
    $region19: #{texual_forward.1} parent=1 // pred_check_branch
      %25 = sbr.rel (0) target = $region21
    $region20: #{texual_forward.1} parent=1 // pred_region
      _
    $region21: #{texual_forward.1} parent=1 // pred_fallthru
      _
    // Predicated region
    $region22: #{texual_forward.1} parent=1 // pred_check
      _
    $region23: #{texual_forward.1} parent=1 // pred_check_branch
      %27 = sbr.rel (0) target = $region25
    $region24: #{texual_forward.1} parent=1 // pred_region
      _
    $region25: #{texual_forward.1} parent=1 // pred_fallthru
      _
    // Predicated region
    $region26: #{texual_forward.1} parent=1 // pred_check
      _
    $region27: #{texual_forward.1} parent=1 // pred_check_branch
      %29 = sbr.rel (0) target = $region29
    $region28: #{texual_forward.1} parent=1 // pred_region
      _
    $region29: #{texual_forward.1} parent=1 // pred_fallthru
      _
    // Predicated region
    $region30: #{texual_forward.1} parent=1 // pred_check
      _
    $region31: #{texual_forward.1} parent=1 // pred_check_branch
      %31 = sbr.rel (0) target = $region33
    $region32: #{texual_forward.1} parent=1 // pred_region
      _
    $region33: #{texual_forward.1} parent=1 // pred_fallthru
      _
    // Predicated region
    $region34: #{texual_forward.1} parent=1 // pred_check
      _
    $region35: #{texual_forward.1} parent=1 // pred_check_branch
      %33 = sbr.rel (0) target = $region37
    $region36: #{texual_forward.1} parent=1 // pred_region
      _
    $region37: #{texual_forward.1} parent=1 // pred_fallthru
      _
    // Predicated region
    $region38: #{texual_forward.1} parent=1 // pred_check
      _
    $region39: #{texual_forward.1} parent=1 // pred_check_branch
      %35 = sbr.rel (0) target = $region41
    $region40: #{texual_forward.1} parent=1 // pred_region
      _
    $region41: #{texual_forward.1} parent=1 // pred_fallthru
      _
    %v37 = vld [vmem:[%s0] sm:$0xff]
    %v38 = vld [vmem:[%s0 + $0x8] sm:$0xff]
    %v39 = vld [vmem:[%s0 + $0x10] sm:$0xff]
    %v40 = vld [vmem:[%s0 + $0x18] sm:$0xff]
    %v41 = vld [vmem:[%s0 + $0x20] sm:$0xff]
    %v42 = vld [vmem:[%s0 + $0x28] sm:$0xff]
    %v43 = vld [vmem:[%s0 + $0x30] sm:$0xff]
    %v44 = vld [vmem:[%s0 + $0x38] sm:$0xff]
    %v45 = vld [vmem:[%s0 + $0x40] sm:$0xff]
    %v46 = vld [vmem:[%s0 + $0x48] sm:$0xff]
    %v47 = vld [vmem:[%s0 + $0x50] sm:$0xff]
    %v48 = vld [vmem:[%s0 + $0x58] sm:$0xff]
    %v49 = vld [vmem:[%s0 + $0x60] sm:$0xff]
    %v50 = vld [vmem:[%s0 + $0x68] sm:$0xff]
    %v51 = vld [vmem:[%s0 + $0x70] sm:$0xff]
    %v52 = vld [vmem:[%s0 + $0x78] sm:$0xff]
    %v53 = vmul.f32 %v37, %v37
    %v54 = vmul.f32 %v38, %v38
    %v55 = vmul.f32 %v39, %v39
    %v56 = vmul.f32 %v40, %v40
    %v57 = vmul.f32 %v41, %v41
    %v58 = vmul.f32 %v42, %v42
    %v59 = vmul.f32 %v43, %v43
    %v60 = vmul.f32 %v44, %v44
    %v61 = vmul.f32 %v45, %v45
    %v62 = vmul.f32 %v46, %v46
    %v63 = vmul.f32 %v47, %v47
    %v64 = vmul.f32 %v48, %v48
    %v65 = vmul.f32 %v49, %v49
    %v66 = vmul.f32 %v50, %v50
    %v67 = vmul.f32 %v51, %v51
    %v68 = vmul.f32 %v52, %v52
    %69 = vadd.xlane.f32.xlu0 %v53
    %v70 = vpop.xlane.xlu0 %69
    %71 = vadd.xlane.f32.xlu0 %v54
    %v72 = vpop.xlane.xlu0 %71
    %73 = vadd.xlane.f32.xlu0 %v55
    %v74 = vpop.xlane.xlu0 %73
    %75 = vadd.xlane.f32.xlu0 %v56
    %v76 = vpop.xlane.xlu0 %75
    %77 = vadd.xlane.f32.xlu0 %v57
    %v78 = vpop.xlane.xlu0 %77
    %79 = vadd.xlane.f32.xlu0 %v58
    %v80 = vpop.xlane.xlu0 %79
    %81 = vadd.xlane.f32.xlu0 %v59
    %v82 = vpop.xlane.xlu0 %81
    %83 = vadd.xlane.f32.xlu0 %v60
    %v84 = vpop.xlane.xlu0 %83
    %85 = vadd.xlane.f32.xlu0 %v61
    %v86 = vpop.xlane.xlu0 %85
    %87 = vadd.xlane.f32.xlu0 %v62
    %v88 = vpop.xlane.xlu0 %87
    %89 = vadd.xlane.f32.xlu0 %v63
    %v90 = vpop.xlane.xlu0 %89
    %91 = vadd.xlane.f32.xlu0 %v64
    %v92 = vpop.xlane.xlu0 %91
    %93 = vadd.xlane.f32.xlu0 %v65
    %v94 = vpop.xlane.xlu0 %93
    %95 = vadd.xlane.f32.xlu0 %v66
    %v96 = vpop.xlane.xlu0 %95
    %97 = vadd.xlane.f32.xlu0 %v67
    %v98 = vpop.xlane.xlu0 %97
    %99 = vadd.xlane.f32.xlu0 %v68
    %v100 = vpop.xlane.xlu0 %99
    %v101 = vadd.f32 %v70, 1e-08
    %v102 = vadd.f32 %v72, 1e-08
    %v103 = vadd.f32 %v74, 1e-08
    %v104 = vadd.f32 %v76, 1e-08
    %v105 = vadd.f32 %v78, 1e-08
    %v106 = vadd.f32 %v80, 1e-08
    %v107 = vadd.f32 %v82, 1e-08
    %v108 = vadd.f32 %v84, 1e-08
    %v109 = vadd.f32 %v86, 1e-08
    %v110 = vadd.f32 %v88, 1e-08
    %v111 = vadd.f32 %v90, 1e-08
    %v112 = vadd.f32 %v92, 1e-08
    %v113 = vadd.f32 %v94, 1e-08
    %v114 = vadd.f32 %v96, 1e-08
    %v115 = vadd.f32 %v98, 1e-08
    %v116 = vadd.f32 %v100, 1e-08
    %v117 = vrsqrt.pop %v101
    %v118 = vrsqrt.pop %v102
    %v119 = vrsqrt.pop %v103
    %v120 = vrsqrt.pop %v104
    %v121 = vrsqrt.pop %v105
    %v122 = vrsqrt.pop %v106
    %v123 = vrsqrt.pop %v107
    %v124 = vrsqrt.pop %v108
    %v125 = vrsqrt.pop %v109
    %v126 = vrsqrt.pop %v110
    %v127 = vrsqrt.pop %v111
    %v128 = vrsqrt.pop %v112
    %v129 = vrsqrt.pop %v113
    %v130 = vrsqrt.pop %v114
    %v131 = vrsqrt.pop %v115
    %v132 = vrsqrt.pop %v116
    %v133 = vmul.f32 %v37, %v117
    %v134 = vmul.f32 %v38, %v118
    %v135 = vmul.f32 %v39, %v119
    %v136 = vmul.f32 %v40, %v120
    %v137 = vmul.f32 %v41, %v121
    %v138 = vmul.f32 %v42, %v122
    %v139 = vmul.f32 %v43, %v123
    %v140 = vmul.f32 %v44, %v124
    %v141 = vmul.f32 %v45, %v125
    %v142 = vmul.f32 %v46, %v126
    %v143 = vmul.f32 %v47, %v127
    %v144 = vmul.f32 %v48, %v128
    %v145 = vmul.f32 %v49, %v129
    %v146 = vmul.f32 %v50, %v130
    %v147 = vmul.f32 %v51, %v131
    %v148 = vmul.f32 %v52, %v132
    %v149 = vpack.c.bf16 %v134, %v133
    %v150 = vpack.c.bf16 %v136, %v135
    %v151 = vpack.c.bf16 %v138, %v137
    %v152 = vpack.c.bf16 %v140, %v139
    %v153 = vpack.c.bf16 %v142, %v141
    %v154 = vpack.c.bf16 %v144, %v143
    %v155 = vpack.c.bf16 %v146, %v145
    %v156 = vpack.c.bf16 %v148, %v147
    %v157 = vld [vmem:[%s4] sm:$0xf]
    %v158 = vld [vmem:[%s4 + $0x4] sm:$0xf]
    %v159 = vld [vmem:[%s4 + $0x8] sm:$0xf]
    %v160 = vld [vmem:[%s4 + $0xc] sm:$0xf]
    %v161 = vld [vmem:[%s4 + $0x10] sm:$0xf]
    %v162 = vld [vmem:[%s4 + $0x14] sm:$0xf]
    %v163 = vld [vmem:[%s4 + $0x18] sm:$0xf]
    %v164 = vld [vmem:[%s4 + $0x1c] sm:$0xf]
    %v165 = vld [vmem:[%s4 + $0x20] sm:$0xf]
    %v166 = vld [vmem:[%s4 + $0x24] sm:$0xf]
    %v167 = vld [vmem:[%s4 + $0x28] sm:$0xf]
    %v168 = vld [vmem:[%s4 + $0x2c] sm:$0xf]
    %v169 = vld [vmem:[%s4 + $0x30] sm:$0xf]
    %v170 = vld [vmem:[%s4 + $0x34] sm:$0xf]
    %v171 = vld [vmem:[%s4 + $0x38] sm:$0xf]
    %v172 = vld [vmem:[%s4 + $0x3c] sm:$0xf]
    %v173 = vld [vmem:[%s5] sm:$0x1]
    %v175 = vlaneseq
    %v176 = vshrl.u32 %v175, 7
    %v177 = vsub.s32 0, %v176
    %v178 = vrot.slane %v173, %v177
    %v196 = vunpack.c.l.b16 %v157
    %v197 = vunpack.c.l.b16 %v158
    %v198 = vunpack.c.l.b16 %v159
    %v199 = vunpack.c.l.b16 %v160
    %v200 = vunpack.c.l.b16 %v161
    %v201 = vunpack.c.l.b16 %v162
    %v202 = vunpack.c.l.b16 %v163
    %v203 = vunpack.c.l.b16 %v164
    %v204 = vunpack.c.l.b16 %v165
    %v205 = vunpack.c.l.b16 %v166
    %v206 = vunpack.c.l.b16 %v167
    %v207 = vunpack.c.l.b16 %v168
    %v208 = vunpack.c.l.b16 %v169
    %v209 = vunpack.c.l.b16 %v170
    %v210 = vunpack.c.l.b16 %v171
    %v211 = vunpack.c.l.b16 %v172
    %v212 = vpack.c.b16 %v197, %v196
    %v213 = vpack.c.b16 %v199, %v198
    %v214 = vpack.c.b16 %v201, %v200
    %v215 = vpack.c.b16 %v203, %v202
    %v216 = vpack.c.b16 %v205, %v204
    %v217 = vpack.c.b16 %v207, %v206
    %v218 = vpack.c.b16 %v209, %v208
    %v219 = vpack.c.b16 %v211, %v210
    %228 = vmatprep.subr.bf16.mxu0 0
    %229 = vmatpush1.bf16.msra.mxu0 %v219
    %230 = vmatprep.subr.bf16.mxu0 0
    %231 = vmatpush1.bf16.msra.mxu0 %v218
    %232 = vmatprep.subr.bf16.mxu0 0
    %233 = vmatpush1.bf16.msra.mxu0 %v217
    %234 = vmatprep.subr.bf16.mxu0 0
    %235 = vmatpush1.bf16.msra.mxu0 %v216
    %236 = vmatprep.subr.bf16.mxu0 0
    %237 = vmatpush1.bf16.msra.mxu0 %v215
    %238 = vmatprep.subr.bf16.mxu0 0
    %239 = vmatpush1.bf16.msra.mxu0 %v214
    %240 = vmatprep.subr.bf16.mxu0 0
    %241 = vmatpush1.bf16.msra.mxu0 %v213
    %242 = vmatprep.subr.bf16.mxu0 0
    %243 = vmatpush1.bf16.msra.mxu0 %v212
    %244 = vmatprep.subr.bf16.mxu0 0
    %245 = vmatpush2.bf16.msra.mxu0 0
    %246 = vmatprep.subr.bf16.mxu0 0
    %247 = vmatpush2.bf16.msra.mxu0 0
    %248 = vmatprep.subr.bf16.mxu0 0
    %249 = vmatpush2.bf16.msra.mxu0 0
    %250 = vmatprep.subr.bf16.mxu0 0
    %251 = vmatpush2.bf16.msra.mxu0 0
    %252 = vmatprep.subr.bf16.mxu0 0
    %253 = vmatpush2.bf16.msra.mxu0 0
    %254 = vmatprep.subr.bf16.mxu0 0
    %255 = vmatpush2.bf16.msra.mxu0 0
    %256 = vmatprep.subr.bf16.mxu0 0
    %257 = vmatpush2.bf16.msra.mxu0 0
    %258 = vmatprep.subr.bf16.mxu0 0
    %259 = vmatpush2.bf16.msra.mxu0 0
    %260 = vmatprep.mubr.bf16.mxu0 0
    %261 = vmatmul.mubr.bf16.gmra.mxu0 %v149
    %v262 = vpop.f32.mrf.mxu0
    %v263 = vadd.f32 %v178, %v262
    %v264 = vpop.f32.mrf.mxu0
    %v265 = vpop.f32.mrf.mxu0
    %v266 = vadd.f32 %v178, %v265
    %v267 = vpop.f32.mrf.mxu0
    %268 = vmatprep.mubr.bf16.mxu0 0
    %269 = vmatmul.mubr.bf16.gmra.mxu0 %v150
    %v270 = vpop.f32.mrf.mxu0
    %v271 = vadd.f32 %v178, %v270
    %v272 = vpop.f32.mrf.mxu0
    %v273 = vpop.f32.mrf.mxu0
    %v274 = vadd.f32 %v178, %v273
    %v275 = vpop.f32.mrf.mxu0
    %276 = vmatprep.mubr.bf16.mxu0 0
    %277 = vmatmul.mubr.bf16.gmra.mxu0 %v151
    %v278 = vpop.f32.mrf.mxu0
    %v279 = vadd.f32 %v178, %v278
    %v280 = vpop.f32.mrf.mxu0
    %v281 = vpop.f32.mrf.mxu0
    %v282 = vadd.f32 %v178, %v281
    %v283 = vpop.f32.mrf.mxu0
    %284 = vmatprep.mubr.bf16.mxu0 0
    %285 = vmatmul.mubr.bf16.gmra.mxu0 %v152
    %v286 = vpop.f32.mrf.mxu0
    %v287 = vadd.f32 %v178, %v286
    %v288 = vpop.f32.mrf.mxu0
    %v289 = vpop.f32.mrf.mxu0
    %v290 = vadd.f32 %v178, %v289
    %v291 = vpop.f32.mrf.mxu0
    %292 = vmatprep.mubr.bf16.mxu0 0
    %293 = vmatmul.mubr.bf16.gmra.mxu0 %v153
    %v294 = vpop.f32.mrf.mxu0
    %v295 = vadd.f32 %v178, %v294
    %v296 = vpop.f32.mrf.mxu0
    %v297 = vpop.f32.mrf.mxu0
    %v298 = vadd.f32 %v178, %v297
    %v299 = vpop.f32.mrf.mxu0
    %300 = vmatprep.mubr.bf16.mxu0 0
    %301 = vmatmul.mubr.bf16.gmra.mxu0 %v154
    %v302 = vpop.f32.mrf.mxu0
    %v303 = vadd.f32 %v178, %v302
    %v304 = vpop.f32.mrf.mxu0
    %v305 = vpop.f32.mrf.mxu0
    %v306 = vadd.f32 %v178, %v305
    %v307 = vpop.f32.mrf.mxu0
    %308 = vmatprep.mubr.bf16.mxu0 0
    %309 = vmatmul.mubr.bf16.gmra.mxu0 %v155
    %v310 = vpop.f32.mrf.mxu0
    %v311 = vadd.f32 %v178, %v310
    %v312 = vpop.f32.mrf.mxu0
    %v313 = vpop.f32.mrf.mxu0
    %v314 = vadd.f32 %v178, %v313
    %v315 = vpop.f32.mrf.mxu0
    %316 = vmatprep.mubr.bf16.mxu0 0
    %317 = vmatmul.mubr.bf16.gmra.mxu0 %v156
    %v318 = vpop.f32.mrf.mxu0
    %v319 = vadd.f32 %v178, %v318
    %v320 = vpop.f32.mrf.mxu0
    %v321 = vpop.f32.mrf.mxu0
    %v322 = vadd.f32 %v178, %v321
    %v323 = vpop.f32.mrf.mxu0
    %324 = vdwg.mxu0
    %v325 = vlaneseq
    %v326 = vshrl.u32 %v325, 7
    %v327 = vadd.s32 %v326, 8
    %v328 = vadd.s32 %v326, 16
    %v329 = vadd.s32 %v326, 24
    %v330 = vadd.s32 %v326, 32
    %v331 = vadd.s32 %v326, 40
    %v332 = vadd.s32 %v326, 48
    %v333 = vadd.s32 %v326, 56
    %v334 = vadd.s32 %v326, 64
    %v335 = vadd.s32 %v326, 72
    %v336 = vadd.s32 %v326, 80
    %v337 = vadd.s32 %v326, 88
    %v338 = vadd.s32 %v326, 96
    %v339 = vadd.s32 %v326, 104
    %v340 = vadd.s32 %v326, 112
    %v341 = vadd.s32 %v326, 120
    %v342 = vand.u32 %v326, 15
    %v343 = vand.u32 %v327, 15
    %v344 = vand.u32 %v328, 15
    %v345 = vand.u32 %v329, 15
    %v346 = vand.u32 %v330, 15
    %v347 = vand.u32 %v331, 15
    %v348 = vand.u32 %v332, 15
    %v349 = vand.u32 %v333, 15
    %v350 = vand.u32 %v334, 15
    %v351 = vand.u32 %v335, 15
    %v352 = vand.u32 %v336, 15
    %v353 = vand.u32 %v337, 15
    %v354 = vand.u32 %v338, 15
    %v355 = vand.u32 %v339, 15
    %v356 = vand.u32 %v340, 15
    %v357 = vand.u32 %v341, 15
    %vm358 = vcmp.lt.s32.totalorder %v342, 10
    %vm359 = vcmp.lt.s32.totalorder %v343, 10
    %vm360 = vcmp.lt.s32.totalorder %v344, 10
    %vm361 = vcmp.lt.s32.totalorder %v345, 10
    %vm362 = vcmp.lt.s32.totalorder %v346, 10
    %vm363 = vcmp.lt.s32.totalorder %v347, 10
    %vm364 = vcmp.lt.s32.totalorder %v348, 10
    %vm365 = vcmp.lt.s32.totalorder %v349, 10
    %vm366 = vcmp.lt.s32.totalorder %v350, 10
    %vm367 = vcmp.lt.s32.totalorder %v351, 10
    %vm368 = vcmp.lt.s32.totalorder %v352, 10
    %vm369 = vcmp.lt.s32.totalorder %v353, 10
    %vm370 = vcmp.lt.s32.totalorder %v354, 10
    %vm371 = vcmp.lt.s32.totalorder %v355, 10
    %vm372 = vcmp.lt.s32.totalorder %v356, 10
    %vm373 = vcmp.lt.s32.totalorder %v357, 10
    %v374 = vsel %vm358, 1.0, 0.0
    %v375 = vsel %vm359, 1.0, 0.0
    %v376 = vsel %vm360, 1.0, 0.0
    %v377 = vsel %vm361, 1.0, 0.0
    %v378 = vsel %vm362, 1.0, 0.0
    %v379 = vsel %vm363, 1.0, 0.0
    %v380 = vsel %vm364, 1.0, 0.0
    %v381 = vsel %vm365, 1.0, 0.0
    %v382 = vsel %vm366, 1.0, 0.0
    %v383 = vsel %vm367, 1.0, 0.0
    %v384 = vsel %vm368, 1.0, 0.0
    %v385 = vsel %vm369, 1.0, 0.0
    %v386 = vsel %vm370, 1.0, 0.0
    %v387 = vsel %vm371, 1.0, 0.0
    %v388 = vsel %vm372, 1.0, 0.0
    %v389 = vsel %vm373, 1.0, 0.0
    %v390 = vmul.f32 %v263, %v374
    %v391 = vmul.f32 %v266, %v375
    %v392 = vmul.f32 %v271, %v376
    %v393 = vmul.f32 %v274, %v377
    %v394 = vmul.f32 %v279, %v378
    %v395 = vmul.f32 %v282, %v379
    %v396 = vmul.f32 %v287, %v380
    %v397 = vmul.f32 %v290, %v381
    %v398 = vmul.f32 %v295, %v382
    %v399 = vmul.f32 %v298, %v383
    %v400 = vmul.f32 %v303, %v384
    %v401 = vmul.f32 %v306, %v385
    %v402 = vmul.f32 %v311, %v386
    %v403 = vmul.f32 %v314, %v387
    %v404 = vmul.f32 %v319, %v388
    %v405 = vmul.f32 %v322, %v389
    %v406 = vadd.f32 %v390, %v391
    %v407 = vadd.f32 %v406, %v392
    %v408 = vadd.f32 %v407, %v393
    %v409 = vadd.f32 %v408, %v394
    %v410 = vadd.f32 %v409, %v395
    %v411 = vadd.f32 %v410, %v396
    %v412 = vadd.f32 %v411, %v397
    %v413 = vadd.f32 %v412, %v398
    %v414 = vadd.f32 %v413, %v399
    %v415 = vadd.f32 %v414, %v400
    %v416 = vadd.f32 %v415, %v401
    %v417 = vadd.f32 %v416, %v402
    %v418 = vadd.f32 %v417, %v403
    %v419 = vadd.f32 %v418, %v404
    %v420 = vadd.f32 %v419, %v405
    %v421 = vrot.slane %v420, 4
    %v422 = vadd.f32 %v420, %v421
    %v423 = vrot.slane %v422, 2
    %v424 = vadd.f32 %v422, %v423
    %v425 = vrot.slane %v424, 1
    %v426 = vadd.f32 %v424, %v425
    %v427 = vmul.f32 %v426, 0.0125
    %v428 = vsub.f32 %v263, %v427
    %v429 = vsub.f32 %v266, %v427
    %v430 = vsub.f32 %v271, %v427
    %v431 = vsub.f32 %v274, %v427
    %v432 = vsub.f32 %v279, %v427
    %v433 = vsub.f32 %v282, %v427
    %v434 = vsub.f32 %v287, %v427
    %v435 = vsub.f32 %v290, %v427
    %v436 = vsub.f32 %v295, %v427
    %v437 = vsub.f32 %v298, %v427
    %v438 = vsub.f32 %v303, %v427
    %v439 = vsub.f32 %v306, %v427
    %v440 = vsub.f32 %v311, %v427
    %v441 = vsub.f32 %v314, %v427
    %v442 = vsub.f32 %v319, %v427
    %v443 = vsub.f32 %v322, %v427
    %v444 = vmul.f32 %v428, %v374
    %v445 = vmul.f32 %v429, %v375
    %v446 = vmul.f32 %v430, %v376
    %v447 = vmul.f32 %v431, %v377
    %v448 = vmul.f32 %v432, %v378
    %v449 = vmul.f32 %v433, %v379
    %v450 = vmul.f32 %v434, %v380
    %v451 = vmul.f32 %v435, %v381
    %v452 = vmul.f32 %v436, %v382
    %v453 = vmul.f32 %v437, %v383
    %v454 = vmul.f32 %v438, %v384
    %v455 = vmul.f32 %v439, %v385
    %v456 = vmul.f32 %v440, %v386
    %v457 = vmul.f32 %v441, %v387
    %v458 = vmul.f32 %v442, %v388
    %v459 = vmul.f32 %v443, %v389
    %v460 = vmul.f32 %v444, %v444
    %v461 = vmul.f32 %v445, %v445
    %v462 = vmul.f32 %v446, %v446
    %v463 = vmul.f32 %v447, %v447
    %v464 = vmul.f32 %v448, %v448
    %v465 = vmul.f32 %v449, %v449
    %v466 = vmul.f32 %v450, %v450
    %v467 = vmul.f32 %v451, %v451
    %v468 = vmul.f32 %v452, %v452
    %v469 = vmul.f32 %v453, %v453
    %v470 = vmul.f32 %v454, %v454
    %v471 = vmul.f32 %v455, %v455
    %v472 = vmul.f32 %v456, %v456
    %v473 = vmul.f32 %v457, %v457
    %v474 = vmul.f32 %v458, %v458
    %v475 = vmul.f32 %v459, %v459
    %v476 = vadd.f32 %v460, %v461
    %v477 = vadd.f32 %v476, %v462
    %v478 = vadd.f32 %v477, %v463
    %v479 = vadd.f32 %v478, %v464
    %v480 = vadd.f32 %v479, %v465
    %v481 = vadd.f32 %v480, %v466
    %v482 = vadd.f32 %v481, %v467
    %v483 = vadd.f32 %v482, %v468
    %v484 = vadd.f32 %v483, %v469
    %v485 = vadd.f32 %v484, %v470
    %v486 = vadd.f32 %v485, %v471
    %v487 = vadd.f32 %v486, %v472
    %v488 = vadd.f32 %v487, %v473
    %v489 = vadd.f32 %v488, %v474
    %v490 = vadd.f32 %v489, %v475
    %v491 = vrot.slane %v490, 4
    %v492 = vadd.f32 %v490, %v491
    %v493 = vrot.slane %v492, 2
    %v494 = vadd.f32 %v492, %v493
    %v495 = vrot.slane %v494, 1
    %v496 = vadd.f32 %v494, %v495
    %v497 = vmul.f32 %v496, 0.0125
    %v498 = vadd.f32 %v497, 1e-05
    %v499 = vrsqrt.pop %v498
    %v500 = vmul.f32 %v428, %v499
    %v501 = vmul.f32 %v429, %v499
    %v502 = vmul.f32 %v430, %v499
    %v503 = vmul.f32 %v431, %v499
    %v504 = vmul.f32 %v432, %v499
    %v505 = vmul.f32 %v433, %v499
    %v506 = vmul.f32 %v434, %v499
    %v507 = vmul.f32 %v435, %v499
    %v508 = vmul.f32 %v436, %v499
    %v509 = vmul.f32 %v437, %v499
    %v510 = vmul.f32 %v438, %v499
    %v511 = vmul.f32 %v439, %v499
    %v512 = vmul.f32 %v440, %v499
    %v513 = vmul.f32 %v441, %v499
    %v514 = vmul.f32 %v442, %v499
    %v515 = vmul.f32 %v443, %v499
    %v516 = vld [vmem:[%s6] sm:$0x1]
    %v518 = vlaneseq
    %v519 = vshrl.u32 %v518, 7
    %v520 = vsub.s32 0, %v519
    %v521 = vrot.slane %v516, %v520
    %v523 = vmul.f32 %v500, %v521
    %v524 = vmul.f32 %v501, %v521
    %v525 = vmul.f32 %v502, %v521
    %v526 = vmul.f32 %v503, %v521
    %v527 = vmul.f32 %v504, %v521
    %v528 = vmul.f32 %v505, %v521
    %v529 = vmul.f32 %v506, %v521
    %v530 = vmul.f32 %v507, %v521
    %v531 = vmul.f32 %v508, %v521
    %v532 = vmul.f32 %v509, %v521
    %v533 = vmul.f32 %v510, %v521
    %v534 = vmul.f32 %v511, %v521
    %v535 = vmul.f32 %v512, %v521
    %v536 = vmul.f32 %v513, %v521
    %v537 = vmul.f32 %v514, %v521
    %v538 = vmul.f32 %v515, %v521
    %v539 = vld [vmem:[%s7] sm:$0x1]
    %v541 = vlaneseq
    %v542 = vshrl.u32 %v541, 7
    %v543 = vsub.s32 0, %v542
    %v544 = vrot.slane %v539, %v543
    %v546 = vadd.f32 %v523, %v544
    %v547 = vadd.f32 %v524, %v544
    %v548 = vadd.f32 %v525, %v544
    %v549 = vadd.f32 %v526, %v544
    %v550 = vadd.f32 %v527, %v544
    %v551 = vadd.f32 %v528, %v544
    %v552 = vadd.f32 %v529, %v544
    %v553 = vadd.f32 %v530, %v544
    %v554 = vadd.f32 %v531, %v544
    %v555 = vadd.f32 %v532, %v544
    %v556 = vadd.f32 %v533, %v544
    %v557 = vadd.f32 %v534, %v544
    %v558 = vadd.f32 %v535, %v544
    %v559 = vadd.f32 %v536, %v544
    %v560 = vadd.f32 %v537, %v544
    %v561 = vadd.f32 %v538, %v544
    %v562 = vmax.f32 %v546, 0.0
    %v563 = vmax.f32 %v547, 0.0
    %v564 = vmax.f32 %v548, 0.0
    %v565 = vmax.f32 %v549, 0.0
    %v566 = vmax.f32 %v550, 0.0
    %v567 = vmax.f32 %v551, 0.0
    %v568 = vmax.f32 %v552, 0.0
    %v569 = vmax.f32 %v553, 0.0
    %v570 = vmax.f32 %v554, 0.0
    %v571 = vmax.f32 %v555, 0.0
    %v572 = vmax.f32 %v556, 0.0
    %v573 = vmax.f32 %v557, 0.0
    %v574 = vmax.f32 %v558, 0.0
    %v575 = vmax.f32 %v559, 0.0
    %v576 = vmax.f32 %v560, 0.0
    %v577 = vmax.f32 %v561, 0.0
    %v578 = vpack.c.bf16 %v563, %v562
    %v579 = vpack.c.bf16 %v565, %v564
    %v580 = vpack.c.bf16 %v567, %v566
    %v581 = vpack.c.bf16 %v569, %v568
    %v582 = vpack.c.bf16 %v571, %v570
    %v583 = vpack.c.bf16 %v573, %v572
    %v584 = vpack.c.bf16 %v575, %v574
    %v585 = vpack.c.bf16 %v577, %v576
    %v586 = vld [vmem:[%s8] sm:$0xff]
    %v587 = vld [vmem:[%s8 + $0x8] sm:$0xff]
    %v588 = vld [vmem:[%s8 + $0x10] sm:$0xff]
    %v589 = vld [vmem:[%s8 + $0x18] sm:$0xff]
    %v590 = vld [vmem:[%s8 + $0x20] sm:$0xff]
    %v591 = vld [vmem:[%s8 + $0x28] sm:$0xff]
    %v592 = vld [vmem:[%s8 + $0x30] sm:$0xff]
    %v593 = vld [vmem:[%s8 + $0x38] sm:$0xff]
    %v594 = vld [vmem:[%s8 + $0x40] sm:$0xff]
    %v595 = vld [vmem:[%s8 + $0x48] sm:$0xff]
    %v596 = vld [vmem:[%s8 + $0x50] sm:$0xff]
    %v597 = vld [vmem:[%s8 + $0x58] sm:$0xff]
    %v598 = vld [vmem:[%s8 + $0x60] sm:$0xff]
    %v599 = vld [vmem:[%s8 + $0x68] sm:$0xff]
    %v600 = vld [vmem:[%s8 + $0x70] sm:$0xff]
    %v601 = vld [vmem:[%s8 + $0x78] sm:$0xff]
    %v602 = vld [vmem:[%s9] sm:$0x3]
    %v604 = vlaneseq
    %v605 = vshrl.u32 %v604, 7
    %v606 = vsub.s32 0, %v605
    %v607 = vrot.slane %v602, %v606
    %v608 = vlaneseq
    %v609 = vshrl.u32 %v608, 7
    %v610 = vsub.s32 1, %v609
    %v611 = vrot.slane %v602, %v610
    %v630 = vunpack.c.l.b16 %v586
    %v631 = vunpack.c.h.b16 %v586
    %v632 = vunpack.c.l.b16 %v587
    %v633 = vunpack.c.h.b16 %v587
    %v634 = vunpack.c.l.b16 %v588
    %v635 = vunpack.c.h.b16 %v588
    %v636 = vunpack.c.l.b16 %v589
    %v637 = vunpack.c.h.b16 %v589
    %v638 = vunpack.c.l.b16 %v590
    %v639 = vunpack.c.h.b16 %v590
    %v640 = vunpack.c.l.b16 %v591
    %v641 = vunpack.c.h.b16 %v591
    %v642 = vunpack.c.l.b16 %v592
    %v643 = vunpack.c.h.b16 %v592
    %v644 = vunpack.c.l.b16 %v593
    %v645 = vunpack.c.h.b16 %v593
    %v646 = vunpack.c.l.b16 %v594
    %v647 = vunpack.c.h.b16 %v594
    %v648 = vunpack.c.l.b16 %v595
    %v649 = vunpack.c.h.b16 %v595
    %v650 = vunpack.c.l.b16 %v596
    %v651 = vunpack.c.h.b16 %v596
    %v652 = vunpack.c.l.b16 %v597
    %v653 = vunpack.c.h.b16 %v597
    %v654 = vunpack.c.l.b16 %v598
    %v655 = vunpack.c.h.b16 %v598
    %v656 = vunpack.c.l.b16 %v599
    %v657 = vunpack.c.h.b16 %v599
    %v658 = vunpack.c.l.b16 %v600
    %v659 = vunpack.c.h.b16 %v600
    %v660 = vunpack.c.l.b16 %v601
    %v661 = vunpack.c.h.b16 %v601
    %v662 = vpack.c.b16 %v632, %v630
    %v663 = vpack.c.b16 %v633, %v631
    %v664 = vpack.c.b16 %v636, %v634
    %v665 = vpack.c.b16 %v637, %v635
    %v666 = vpack.c.b16 %v640, %v638
    %v667 = vpack.c.b16 %v641, %v639
    %v668 = vpack.c.b16 %v644, %v642
    %v669 = vpack.c.b16 %v645, %v643
    %v670 = vpack.c.b16 %v648, %v646
    %v671 = vpack.c.b16 %v649, %v647
    %v672 = vpack.c.b16 %v652, %v650
    %v673 = vpack.c.b16 %v653, %v651
    %v674 = vpack.c.b16 %v656, %v654
    %v675 = vpack.c.b16 %v657, %v655
    %v676 = vpack.c.b16 %v660, %v658
    %v677 = vpack.c.b16 %v661, %v659
    %694 = vmatprep.subr.bf16.mxu0 %v677
    %695 = vmatpush1.bf16.msra.mxu0 %v676
    %696 = vmatprep.subr.bf16.mxu0 %v675
    %697 = vmatpush1.bf16.msra.mxu0 %v674
    %698 = vmatprep.subr.bf16.mxu0 %v673
    %699 = vmatpush1.bf16.msra.mxu0 %v672
    %700 = vmatprep.subr.bf16.mxu0 %v671
    %701 = vmatpush1.bf16.msra.mxu0 %v670
    %702 = vmatprep.subr.bf16.mxu0 %v669
    %703 = vmatpush1.bf16.msra.mxu0 %v668
    %704 = vmatprep.subr.bf16.mxu0 %v667
    %705 = vmatpush1.bf16.msra.mxu0 %v666
    %706 = vmatprep.subr.bf16.mxu0 %v665
    %707 = vmatpush1.bf16.msra.mxu0 %v664
    %708 = vmatprep.subr.bf16.mxu0 %v663
    %709 = vmatpush1.bf16.msra.mxu0 %v662
    %710 = vmatprep.subr.bf16.mxu0 0
    %711 = vmatpush2.bf16.msra.mxu0 0
    %712 = vmatprep.subr.bf16.mxu0 0
    %713 = vmatpush2.bf16.msra.mxu0 0
    %714 = vmatprep.subr.bf16.mxu0 0
    %715 = vmatpush2.bf16.msra.mxu0 0
    %716 = vmatprep.subr.bf16.mxu0 0
    %717 = vmatpush2.bf16.msra.mxu0 0
    %718 = vmatprep.subr.bf16.mxu0 0
    %719 = vmatpush2.bf16.msra.mxu0 0
    %720 = vmatprep.subr.bf16.mxu0 0
    %721 = vmatpush2.bf16.msra.mxu0 0
    %722 = vmatprep.subr.bf16.mxu0 0
    %723 = vmatpush2.bf16.msra.mxu0 0
    %724 = vmatprep.subr.bf16.mxu0 0
    %725 = vmatpush2.bf16.msra.mxu0 0
    %726 = vmatprep.mubr.bf16.mxu0 0
    %727 = vmatmul.mubr.bf16.gmra.mxu0 %v578
    %v728 = vpop.f32.mrf.mxu0
    %v729 = vadd.f32 %v607, %v728
    %v730 = vpop.f32.mrf.mxu0
    %v731 = vadd.f32 %v611, %v730
    %v732 = vpop.f32.mrf.mxu0
    %v733 = vadd.f32 %v607, %v732
    %v734 = vpop.f32.mrf.mxu0
    %v735 = vadd.f32 %v611, %v734
    %736 = vmatprep.mubr.bf16.mxu0 0
    %737 = vmatmul.mubr.bf16.gmra.mxu0 %v579
    %v738 = vpop.f32.mrf.mxu0
    %v739 = vadd.f32 %v607, %v738
    %v740 = vpop.f32.mrf.mxu0
    %v741 = vadd.f32 %v611, %v740
    %v742 = vpop.f32.mrf.mxu0
    %v743 = vadd.f32 %v607, %v742
    %v744 = vpop.f32.mrf.mxu0
    %v745 = vadd.f32 %v611, %v744
    %746 = vmatprep.mubr.bf16.mxu0 0
    %747 = vmatmul.mubr.bf16.gmra.mxu0 %v580
    %v748 = vpop.f32.mrf.mxu0
    %v749 = vadd.f32 %v607, %v748
    %v750 = vpop.f32.mrf.mxu0
    %v751 = vadd.f32 %v611, %v750
    %v752 = vpop.f32.mrf.mxu0
    %v753 = vadd.f32 %v607, %v752
    %v754 = vpop.f32.mrf.mxu0
    %v755 = vadd.f32 %v611, %v754
    %756 = vmatprep.mubr.bf16.mxu0 0
    %757 = vmatmul.mubr.bf16.gmra.mxu0 %v581
    %v758 = vpop.f32.mrf.mxu0
    %v759 = vadd.f32 %v607, %v758
    %v760 = vpop.f32.mrf.mxu0
    %v761 = vadd.f32 %v611, %v760
    %v762 = vpop.f32.mrf.mxu0
    %v763 = vadd.f32 %v607, %v762
    %v764 = vpop.f32.mrf.mxu0
    %v765 = vadd.f32 %v611, %v764
    %766 = vmatprep.mubr.bf16.mxu0 0
    %767 = vmatmul.mubr.bf16.gmra.mxu0 %v582
    %v768 = vpop.f32.mrf.mxu0
    %v769 = vadd.f32 %v607, %v768
    %v770 = vpop.f32.mrf.mxu0
    %v771 = vadd.f32 %v611, %v770
    %v772 = vpop.f32.mrf.mxu0
    %v773 = vadd.f32 %v607, %v772
    %v774 = vpop.f32.mrf.mxu0
    %v775 = vadd.f32 %v611, %v774
    %776 = vmatprep.mubr.bf16.mxu0 0
    %777 = vmatmul.mubr.bf16.gmra.mxu0 %v583
    %v778 = vpop.f32.mrf.mxu0
    %v779 = vadd.f32 %v607, %v778
    %v780 = vpop.f32.mrf.mxu0
    %v781 = vadd.f32 %v611, %v780
    %v782 = vpop.f32.mrf.mxu0
    %v783 = vadd.f32 %v607, %v782
    %v784 = vpop.f32.mrf.mxu0
    %v785 = vadd.f32 %v611, %v784
    %786 = vmatprep.mubr.bf16.mxu0 0
    %787 = vmatmul.mubr.bf16.gmra.mxu0 %v584
    %v788 = vpop.f32.mrf.mxu0
    %v789 = vadd.f32 %v607, %v788
    %v790 = vpop.f32.mrf.mxu0
    %v791 = vadd.f32 %v611, %v790
    %v792 = vpop.f32.mrf.mxu0
    %v793 = vadd.f32 %v607, %v792
    %v794 = vpop.f32.mrf.mxu0
    %v795 = vadd.f32 %v611, %v794
    %796 = vmatprep.mubr.bf16.mxu0 0
    %797 = vmatmul.mubr.bf16.gmra.mxu0 %v585
    %v798 = vpop.f32.mrf.mxu0
    %v799 = vadd.f32 %v607, %v798
    %v800 = vpop.f32.mrf.mxu0
    %v801 = vadd.f32 %v611, %v800
    %v802 = vpop.f32.mrf.mxu0
    %v803 = vadd.f32 %v607, %v802
    %v804 = vpop.f32.mrf.mxu0
    %v805 = vadd.f32 %v611, %v804
    %806 = vdwg.mxu0
    %v807 = vld [vmem:[%s2] sm:$0xff]
    %v808 = vld [vmem:[%s2 + $0x8] sm:$0xff]
    %v809 = vld [vmem:[%s2 + $0x10] sm:$0xff]
    %v810 = vld [vmem:[%s2 + $0x18] sm:$0xff]
    %v811 = vld [vmem:[%s2 + $0x20] sm:$0xff]
    %v812 = vld [vmem:[%s2 + $0x28] sm:$0xff]
    %v813 = vld [vmem:[%s2 + $0x30] sm:$0xff]
    %v814 = vld [vmem:[%s2 + $0x38] sm:$0xff]
    %v815 = vld [vmem:[%s2 + $0x40] sm:$0xff]
    %v816 = vld [vmem:[%s2 + $0x48] sm:$0xff]
    %v817 = vld [vmem:[%s2 + $0x50] sm:$0xff]
    %v818 = vld [vmem:[%s2 + $0x58] sm:$0xff]
    %v819 = vld [vmem:[%s2 + $0x60] sm:$0xff]
    %v820 = vld [vmem:[%s2 + $0x68] sm:$0xff]
    %v821 = vld [vmem:[%s2 + $0x70] sm:$0xff]
    %v822 = vld [vmem:[%s2 + $0x78] sm:$0xff]
    %v823 = vld [vmem:[%s3] sm:$0x3]
    %v825 = vlaneseq
    %v826 = vshrl.u32 %v825, 7
    %v827 = vsub.s32 0, %v826
    %v828 = vrot.slane %v823, %v827
    %v829 = vlaneseq
    %v830 = vshrl.u32 %v829, 7
    %v831 = vsub.s32 1, %v830
    %v832 = vrot.slane %v823, %v831
    %v851 = vunpack.c.l.b16 %v807
    %v852 = vunpack.c.h.b16 %v807
    %v853 = vunpack.c.l.b16 %v808
    %v854 = vunpack.c.h.b16 %v808
    %v855 = vunpack.c.l.b16 %v809
    %v856 = vunpack.c.h.b16 %v809
    %v857 = vunpack.c.l.b16 %v810
    %v858 = vunpack.c.h.b16 %v810
    %v859 = vunpack.c.l.b16 %v811
    %v860 = vunpack.c.h.b16 %v811
    %v861 = vunpack.c.l.b16 %v812
    %v862 = vunpack.c.h.b16 %v812
    %v863 = vunpack.c.l.b16 %v813
    %v864 = vunpack.c.h.b16 %v813
    %v865 = vunpack.c.l.b16 %v814
    %v866 = vunpack.c.h.b16 %v814
    %v867 = vunpack.c.l.b16 %v815
    %v868 = vunpack.c.h.b16 %v815
    %v869 = vunpack.c.l.b16 %v816
    %v870 = vunpack.c.h.b16 %v816
    %v871 = vunpack.c.l.b16 %v817
    %v872 = vunpack.c.h.b16 %v817
    %v873 = vunpack.c.l.b16 %v818
    %v874 = vunpack.c.h.b16 %v818
    %v875 = vunpack.c.l.b16 %v819
    %v876 = vunpack.c.h.b16 %v819
    %v877 = vunpack.c.l.b16 %v820
    %v878 = vunpack.c.h.b16 %v820
    %v879 = vunpack.c.l.b16 %v821
    %v880 = vunpack.c.h.b16 %v821
    %v881 = vunpack.c.l.b16 %v822
    %v882 = vunpack.c.h.b16 %v822
    %v883 = vpack.c.b16 %v853, %v851
    %v884 = vpack.c.b16 %v854, %v852
    %v885 = vpack.c.b16 %v857, %v855
    %v886 = vpack.c.b16 %v858, %v856
    %v887 = vpack.c.b16 %v861, %v859
    %v888 = vpack.c.b16 %v862, %v860
    %v889 = vpack.c.b16 %v865, %v863
    %v890 = vpack.c.b16 %v866, %v864
    %v891 = vpack.c.b16 %v869, %v867
    %v892 = vpack.c.b16 %v870, %v868
    %v893 = vpack.c.b16 %v873, %v871
    %v894 = vpack.c.b16 %v874, %v872
    %v895 = vpack.c.b16 %v877, %v875
    %v896 = vpack.c.b16 %v878, %v876
    %v897 = vpack.c.b16 %v881, %v879
    %v898 = vpack.c.b16 %v882, %v880
    %915 = vmatprep.subr.bf16.mxu0 %v898
    %916 = vmatpush1.bf16.msra.mxu0 %v897
    %917 = vmatprep.subr.bf16.mxu0 %v896
    %918 = vmatpush1.bf16.msra.mxu0 %v895
    %919 = vmatprep.subr.bf16.mxu0 %v894
    %920 = vmatpush1.bf16.msra.mxu0 %v893
    %921 = vmatprep.subr.bf16.mxu0 %v892
    %922 = vmatpush1.bf16.msra.mxu0 %v891
    %923 = vmatprep.subr.bf16.mxu0 %v890
    %924 = vmatpush1.bf16.msra.mxu0 %v889
    %925 = vmatprep.subr.bf16.mxu0 %v888
    %926 = vmatpush1.bf16.msra.mxu0 %v887
    %927 = vmatprep.subr.bf16.mxu0 %v886
    %928 = vmatpush1.bf16.msra.mxu0 %v885
    %929 = vmatprep.subr.bf16.mxu0 %v884
    %930 = vmatpush1.bf16.msra.mxu0 %v883
    %931 = vmatprep.subr.bf16.mxu0 0
    %932 = vmatpush2.bf16.msra.mxu0 0
    %933 = vmatprep.subr.bf16.mxu0 0
    %934 = vmatpush2.bf16.msra.mxu0 0
    %935 = vmatprep.subr.bf16.mxu0 0
    %936 = vmatpush2.bf16.msra.mxu0 0
    %937 = vmatprep.subr.bf16.mxu0 0
    %938 = vmatpush2.bf16.msra.mxu0 0
    %939 = vmatprep.subr.bf16.mxu0 0
    %940 = vmatpush2.bf16.msra.mxu0 0
    %941 = vmatprep.subr.bf16.mxu0 0
    %942 = vmatpush2.bf16.msra.mxu0 0
    %943 = vmatprep.subr.bf16.mxu0 0
    %944 = vmatpush2.bf16.msra.mxu0 0
    %945 = vmatprep.subr.bf16.mxu0 0
    %946 = vmatpush2.bf16.msra.mxu0 0
    %947 = vmatprep.mubr.bf16.mxu0 0
    %948 = vmatmul.mubr.bf16.gmra.mxu0 %v149
    %v949 = vpop.f32.mrf.mxu0
    %v950 = vadd.f32 %v828, %v949
    %v951 = vpop.f32.mrf.mxu0
    %v952 = vadd.f32 %v832, %v951
    %v953 = vpop.f32.mrf.mxu0
    %v954 = vadd.f32 %v828, %v953
    %v955 = vpop.f32.mrf.mxu0
    %v956 = vadd.f32 %v832, %v955
    %957 = vmatprep.mubr.bf16.mxu0 0
    %958 = vmatmul.mubr.bf16.gmra.mxu0 %v150
    %v959 = vpop.f32.mrf.mxu0
    %v960 = vadd.f32 %v828, %v959
    %v961 = vpop.f32.mrf.mxu0
    %v962 = vadd.f32 %v832, %v961
    %v963 = vpop.f32.mrf.mxu0
    %v964 = vadd.f32 %v828, %v963
    %v965 = vpop.f32.mrf.mxu0
    %v966 = vadd.f32 %v832, %v965
    %967 = vmatprep.mubr.bf16.mxu0 0
    %968 = vmatmul.mubr.bf16.gmra.mxu0 %v151
    %v969 = vpop.f32.mrf.mxu0
    %v970 = vadd.f32 %v828, %v969
    %v971 = vpop.f32.mrf.mxu0
    %v972 = vadd.f32 %v832, %v971
    %v973 = vpop.f32.mrf.mxu0
    %v974 = vadd.f32 %v828, %v973
    %v975 = vpop.f32.mrf.mxu0
    %v976 = vadd.f32 %v832, %v975
    %977 = vmatprep.mubr.bf16.mxu0 0
    %978 = vmatmul.mubr.bf16.gmra.mxu0 %v152
    %v979 = vpop.f32.mrf.mxu0
    %v980 = vadd.f32 %v828, %v979
    %v981 = vpop.f32.mrf.mxu0
    %v982 = vadd.f32 %v832, %v981
    %v983 = vpop.f32.mrf.mxu0
    %v984 = vadd.f32 %v828, %v983
    %v985 = vpop.f32.mrf.mxu0
    %v986 = vadd.f32 %v832, %v985
    %987 = vmatprep.mubr.bf16.mxu0 0
    %988 = vmatmul.mubr.bf16.gmra.mxu0 %v153
    %v989 = vpop.f32.mrf.mxu0
    %v990 = vadd.f32 %v828, %v989
    %v991 = vpop.f32.mrf.mxu0
    %v992 = vadd.f32 %v832, %v991
    %v993 = vpop.f32.mrf.mxu0
    %v994 = vadd.f32 %v828, %v993
    %v995 = vpop.f32.mrf.mxu0
    %v996 = vadd.f32 %v832, %v995
    %997 = vmatprep.mubr.bf16.mxu0 0
    %998 = vmatmul.mubr.bf16.gmra.mxu0 %v154
    %v999 = vpop.f32.mrf.mxu0
    %v1000 = vadd.f32 %v828, %v999
    %v1001 = vpop.f32.mrf.mxu0
    %v1002 = vadd.f32 %v832, %v1001
    %v1003 = vpop.f32.mrf.mxu0
    %v1004 = vadd.f32 %v828, %v1003
    %v1005 = vpop.f32.mrf.mxu0
    %v1006 = vadd.f32 %v832, %v1005
    %1007 = vmatprep.mubr.bf16.mxu0 0
    %1008 = vmatmul.mubr.bf16.gmra.mxu0 %v155
    %v1009 = vpop.f32.mrf.mxu0
    %v1010 = vadd.f32 %v828, %v1009
    %v1011 = vpop.f32.mrf.mxu0
    %v1012 = vadd.f32 %v832, %v1011
    %v1013 = vpop.f32.mrf.mxu0
    %v1014 = vadd.f32 %v828, %v1013
    %v1015 = vpop.f32.mrf.mxu0
    %v1016 = vadd.f32 %v832, %v1015
    %1017 = vmatprep.mubr.bf16.mxu0 0
    %1018 = vmatmul.mubr.bf16.gmra.mxu0 %v156
    %v1019 = vpop.f32.mrf.mxu0
    %v1020 = vadd.f32 %v828, %v1019
    %v1021 = vpop.f32.mrf.mxu0
    %v1022 = vadd.f32 %v832, %v1021
    %v1023 = vpop.f32.mrf.mxu0
    %v1024 = vadd.f32 %v828, %v1023
    %v1025 = vpop.f32.mrf.mxu0
    %v1026 = vadd.f32 %v832, %v1025
    %1027 = vdwg.mxu0
    %v1028 = vadd.f32 %v729, %v950
    %v1029 = vadd.f32 %v731, %v952
    %v1030 = vadd.f32 %v733, %v954
    %v1031 = vadd.f32 %v735, %v956
    %v1032 = vadd.f32 %v739, %v960
    %v1033 = vadd.f32 %v741, %v962
    %v1034 = vadd.f32 %v743, %v964
    %v1035 = vadd.f32 %v745, %v966
    %v1036 = vadd.f32 %v749, %v970
    %v1037 = vadd.f32 %v751, %v972
    %v1038 = vadd.f32 %v753, %v974
    %v1039 = vadd.f32 %v755, %v976
    %v1040 = vadd.f32 %v759, %v980
    %v1041 = vadd.f32 %v761, %v982
    %v1042 = vadd.f32 %v763, %v984
    %v1043 = vadd.f32 %v765, %v986
    %v1044 = vadd.f32 %v769, %v990
    %v1045 = vadd.f32 %v771, %v992
    %v1046 = vadd.f32 %v773, %v994
    %v1047 = vadd.f32 %v775, %v996
    %v1048 = vadd.f32 %v779, %v1000
    %v1049 = vadd.f32 %v781, %v1002
    %v1050 = vadd.f32 %v783, %v1004
    %v1051 = vadd.f32 %v785, %v1006
    %v1052 = vadd.f32 %v789, %v1010
    %v1053 = vadd.f32 %v791, %v1012
    %v1054 = vadd.f32 %v793, %v1014
    %v1055 = vadd.f32 %v795, %v1016
    %v1056 = vadd.f32 %v799, %v1020
    %v1057 = vadd.f32 %v801, %v1022
    %v1058 = vadd.f32 %v803, %v1024
    %v1059 = vadd.f32 %v805, %v1026
    %v1060 = vld [vmem:[%s1] sm:$0xff]
    %v1061 = vld [vmem:[%s1 + $0x8] sm:$0xff]
    %v1062 = vld [vmem:[%s1 + $0x10] sm:$0xff]
    %v1063 = vld [vmem:[%s1 + $0x18] sm:$0xff]
    %v1064 = vld [vmem:[%s1 + $0x20] sm:$0xff]
    %v1065 = vld [vmem:[%s1 + $0x28] sm:$0xff]
    %v1066 = vld [vmem:[%s1 + $0x30] sm:$0xff]
    %v1067 = vld [vmem:[%s1 + $0x38] sm:$0xff]
    %v1068 = vld [vmem:[%s1 + $0x40] sm:$0xff]
    %v1069 = vld [vmem:[%s1 + $0x48] sm:$0xff]
    %v1070 = vld [vmem:[%s1 + $0x50] sm:$0xff]
    %v1071 = vld [vmem:[%s1 + $0x58] sm:$0xff]
    %v1072 = vld [vmem:[%s1 + $0x60] sm:$0xff]
    %v1073 = vld [vmem:[%s1 + $0x68] sm:$0xff]
    %v1074 = vld [vmem:[%s1 + $0x70] sm:$0xff]
    %v1075 = vld [vmem:[%s1 + $0x78] sm:$0xff]
    %vm1076 = vcmp.gt.f32.partialorder %v1060, 0.0
    %vm1077 = vcmp.gt.f32.partialorder %v1061, 0.0
    %vm1078 = vcmp.gt.f32.partialorder %v1062, 0.0
    %vm1079 = vcmp.gt.f32.partialorder %v1063, 0.0
    %vm1080 = vcmp.gt.f32.partialorder %v1064, 0.0
    %vm1081 = vcmp.gt.f32.partialorder %v1065, 0.0
    %vm1082 = vcmp.gt.f32.partialorder %v1066, 0.0
    %vm1083 = vcmp.gt.f32.partialorder %v1067, 0.0
    %vm1084 = vcmp.gt.f32.partialorder %v1068, 0.0
    %vm1085 = vcmp.gt.f32.partialorder %v1069, 0.0
    %vm1086 = vcmp.gt.f32.partialorder %v1070, 0.0
    %vm1087 = vcmp.gt.f32.partialorder %v1071, 0.0
    %vm1088 = vcmp.gt.f32.partialorder %v1072, 0.0
    %vm1089 = vcmp.gt.f32.partialorder %v1073, 0.0
    %vm1090 = vcmp.gt.f32.partialorder %v1074, 0.0
    %vm1091 = vcmp.gt.f32.partialorder %v1075, 0.0
    %v1092 = vsel %vm1076, 1, 0
    %v1093 = vsel %vm1077, 1, 0
    %v1094 = vsel %vm1078, 1, 0
    %v1095 = vsel %vm1079, 1, 0
    %v1096 = vsel %vm1080, 1, 0
    %v1097 = vsel %vm1081, 1, 0
    %v1098 = vsel %vm1082, 1, 0
    %v1099 = vsel %vm1083, 1, 0
    %v1100 = vsel %vm1084, 1, 0
    %v1101 = vsel %vm1085, 1, 0
    %v1102 = vsel %vm1086, 1, 0
    %v1103 = vsel %vm1087, 1, 0
    %v1104 = vsel %vm1088, 1, 0
    %v1105 = vsel %vm1089, 1, 0
    %v1106 = vsel %vm1090, 1, 0
    %v1107 = vsel %vm1091, 1, 0
    %1108 = vset.pattern.permute.xlu0 0
    %1109 = vperm.xlu0 %1108, %v1092
    %v1110 = vpop.permute.xlu0 %1109
    %1111 = vset.pattern.permute.xlu0 0
    %1112 = vperm.xlu0 %1111, %v1093
    %v1113 = vpop.permute.xlu0 %1112
    %1114 = vset.pattern.permute.xlu0 0
    %1115 = vperm.xlu0 %1114, %v1094
    %v1116 = vpop.permute.xlu0 %1115
    %1117 = vset.pattern.permute.xlu0 0
    %1118 = vperm.xlu0 %1117, %v1095
    %v1119 = vpop.permute.xlu0 %1118
    %1120 = vset.pattern.permute.xlu0 0
    %1121 = vperm.xlu0 %1120, %v1096
    %v1122 = vpop.permute.xlu0 %1121
    %1123 = vset.pattern.permute.xlu0 0
    %1124 = vperm.xlu0 %1123, %v1097
    %v1125 = vpop.permute.xlu0 %1124
    %1126 = vset.pattern.permute.xlu0 0
    %1127 = vperm.xlu0 %1126, %v1098
    %v1128 = vpop.permute.xlu0 %1127
    %1129 = vset.pattern.permute.xlu0 0
    %1130 = vperm.xlu0 %1129, %v1099
    %v1131 = vpop.permute.xlu0 %1130
    %1132 = vset.pattern.permute.xlu0 0
    %1133 = vperm.xlu0 %1132, %v1100
    %v1134 = vpop.permute.xlu0 %1133
    %1135 = vset.pattern.permute.xlu0 0
    %1136 = vperm.xlu0 %1135, %v1101
    %v1137 = vpop.permute.xlu0 %1136
    %1138 = vset.pattern.permute.xlu0 0
    %1139 = vperm.xlu0 %1138, %v1102
    %v1140 = vpop.permute.xlu0 %1139
    %1141 = vset.pattern.permute.xlu0 0
    %1142 = vperm.xlu0 %1141, %v1103
    %v1143 = vpop.permute.xlu0 %1142
    %1144 = vset.pattern.permute.xlu0 0
    %1145 = vperm.xlu0 %1144, %v1104
    %v1146 = vpop.permute.xlu0 %1145
    %1147 = vset.pattern.permute.xlu0 0
    %1148 = vperm.xlu0 %1147, %v1105
    %v1149 = vpop.permute.xlu0 %1148
    %1150 = vset.pattern.permute.xlu0 0
    %1151 = vperm.xlu0 %1150, %v1106
    %v1152 = vpop.permute.xlu0 %1151
    %1153 = vset.pattern.permute.xlu0 0
    %1154 = vperm.xlu0 %1153, %v1107
    %v1155 = vpop.permute.xlu0 %1154
    %vm1156 = vcmp.eq.s32.totalorder %v1110, 1
    %vm1157 = vcmp.eq.s32.totalorder %v1113, 1
    %vm1158 = vcmp.eq.s32.totalorder %v1116, 1
    %vm1159 = vcmp.eq.s32.totalorder %v1119, 1
    %vm1160 = vcmp.eq.s32.totalorder %v1122, 1
    %vm1161 = vcmp.eq.s32.totalorder %v1125, 1
    %vm1162 = vcmp.eq.s32.totalorder %v1128, 1
    %vm1163 = vcmp.eq.s32.totalorder %v1131, 1
    %vm1164 = vcmp.eq.s32.totalorder %v1134, 1
    %vm1165 = vcmp.eq.s32.totalorder %v1137, 1
    %vm1166 = vcmp.eq.s32.totalorder %v1140, 1
    %vm1167 = vcmp.eq.s32.totalorder %v1143, 1
    %vm1168 = vcmp.eq.s32.totalorder %v1146, 1
    %vm1169 = vcmp.eq.s32.totalorder %v1149, 1
    %vm1170 = vcmp.eq.s32.totalorder %v1152, 1
    %vm1171 = vcmp.eq.s32.totalorder %v1155, 1
    %v1172 = vsel %vm1156, %v1028, -inf
    %v1173 = vsel %vm1156, %v1029, -inf
    %v1174 = vsel %vm1157, %v1030, -inf
    %v1175 = vsel %vm1157, %v1031, -inf
    %v1176 = vsel %vm1158, %v1032, -inf
    %v1177 = vsel %vm1158, %v1033, -inf
    %v1178 = vsel %vm1159, %v1034, -inf
    %v1179 = vsel %vm1159, %v1035, -inf
    %v1180 = vsel %vm1160, %v1036, -inf
    %v1181 = vsel %vm1160, %v1037, -inf
    %v1182 = vsel %vm1161, %v1038, -inf
    %v1183 = vsel %vm1161, %v1039, -inf
    %v1184 = vsel %vm1162, %v1040, -inf
    %v1185 = vsel %vm1162, %v1041, -inf
    %v1186 = vsel %vm1163, %v1042, -inf
    %v1187 = vsel %vm1163, %v1043, -inf
    %v1188 = vsel %vm1164, %v1044, -inf
    %v1189 = vsel %vm1164, %v1045, -inf
    %v1190 = vsel %vm1165, %v1046, -inf
    %v1191 = vsel %vm1165, %v1047, -inf
    %v1192 = vsel %vm1166, %v1048, -inf
    %v1193 = vsel %vm1166, %v1049, -inf
    %v1194 = vsel %vm1167, %v1050, -inf
    %v1195 = vsel %vm1167, %v1051, -inf
    %v1196 = vsel %vm1168, %v1052, -inf
    %v1197 = vsel %vm1168, %v1053, -inf
    %v1198 = vsel %vm1169, %v1054, -inf
    %v1199 = vsel %vm1169, %v1055, -inf
    %v1200 = vsel %vm1170, %v1056, -inf
    %v1201 = vsel %vm1170, %v1057, -inf
    %v1202 = vsel %vm1171, %v1058, -inf
    %v1203 = vsel %vm1171, %v1059, -inf
    %v1204 = vmax.f32 %v1172, %v1174
    %v1205 = vrot.slane %v1204, 4
    %v1206 = vmax.f32 %v1204, %v1205
    %v1207 = vrot.slane %v1206, 2
    %v1208 = vmax.f32 %v1206, %v1207
    %v1209 = vrot.slane %v1208, 1
    %v1210 = vmax.f32 %v1208, %v1209
    %v1211 = vmax.f32 %v1173, %v1175
    %v1212 = vrot.slane %v1211, 4
    %v1213 = vmax.f32 %v1211, %v1212
    %v1214 = vrot.slane %v1213, 2
    %v1215 = vmax.f32 %v1213, %v1214
    %v1216 = vrot.slane %v1215, 1
    %v1217 = vmax.f32 %v1215, %v1216
    %v1218 = vmax.f32 %v1176, %v1178
    %v1219 = vrot.slane %v1218, 4
    %v1220 = vmax.f32 %v1218, %v1219
    %v1221 = vrot.slane %v1220, 2
    %v1222 = vmax.f32 %v1220, %v1221
    %v1223 = vrot.slane %v1222, 1
    %v1224 = vmax.f32 %v1222, %v1223
    %v1225 = vmax.f32 %v1177, %v1179
    %v1226 = vrot.slane %v1225, 4
    %v1227 = vmax.f32 %v1225, %v1226
    %v1228 = vrot.slane %v1227, 2
    %v1229 = vmax.f32 %v1227, %v1228
    %v1230 = vrot.slane %v1229, 1
    %v1231 = vmax.f32 %v1229, %v1230
    %v1232 = vmax.f32 %v1180, %v1182
    %v1233 = vrot.slane %v1232, 4
    %v1234 = vmax.f32 %v1232, %v1233
    %v1235 = vrot.slane %v1234, 2
    %v1236 = vmax.f32 %v1234, %v1235
    %v1237 = vrot.slane %v1236, 1
    %v1238 = vmax.f32 %v1236, %v1237
    %v1239 = vmax.f32 %v1181, %v1183
    %v1240 = vrot.slane %v1239, 4
    %v1241 = vmax.f32 %v1239, %v1240
    %v1242 = vrot.slane %v1241, 2
    %v1243 = vmax.f32 %v1241, %v1242
    %v1244 = vrot.slane %v1243, 1
    %v1245 = vmax.f32 %v1243, %v1244
    %v1246 = vmax.f32 %v1184, %v1186
    %v1247 = vrot.slane %v1246, 4
    %v1248 = vmax.f32 %v1246, %v1247
    %v1249 = vrot.slane %v1248, 2
    %v1250 = vmax.f32 %v1248, %v1249
    %v1251 = vrot.slane %v1250, 1
    %v1252 = vmax.f32 %v1250, %v1251
    %v1253 = vmax.f32 %v1185, %v1187
    %v1254 = vrot.slane %v1253, 4
    %v1255 = vmax.f32 %v1253, %v1254
    %v1256 = vrot.slane %v1255, 2
    %v1257 = vmax.f32 %v1255, %v1256
    %v1258 = vrot.slane %v1257, 1
    %v1259 = vmax.f32 %v1257, %v1258
    %v1260 = vmax.f32 %v1188, %v1190
    %v1261 = vrot.slane %v1260, 4
    %v1262 = vmax.f32 %v1260, %v1261
    %v1263 = vrot.slane %v1262, 2
    %v1264 = vmax.f32 %v1262, %v1263
    %v1265 = vrot.slane %v1264, 1
    %v1266 = vmax.f32 %v1264, %v1265
    %v1267 = vmax.f32 %v1189, %v1191
    %v1268 = vrot.slane %v1267, 4
    %v1269 = vmax.f32 %v1267, %v1268
    %v1270 = vrot.slane %v1269, 2
    %v1271 = vmax.f32 %v1269, %v1270
    %v1272 = vrot.slane %v1271, 1
    %v1273 = vmax.f32 %v1271, %v1272
    %v1274 = vmax.f32 %v1192, %v1194
    %v1275 = vrot.slane %v1274, 4
    %v1276 = vmax.f32 %v1274, %v1275
    %v1277 = vrot.slane %v1276, 2
    %v1278 = vmax.f32 %v1276, %v1277
    %v1279 = vrot.slane %v1278, 1
    %v1280 = vmax.f32 %v1278, %v1279
    %v1281 = vmax.f32 %v1193, %v1195
    %v1282 = vrot.slane %v1281, 4
    %v1283 = vmax.f32 %v1281, %v1282
    %v1284 = vrot.slane %v1283, 2
    %v1285 = vmax.f32 %v1283, %v1284
    %v1286 = vrot.slane %v1285, 1
    %v1287 = vmax.f32 %v1285, %v1286
    %v1288 = vmax.f32 %v1196, %v1198
    %v1289 = vrot.slane %v1288, 4
    %v1290 = vmax.f32 %v1288, %v1289
    %v1291 = vrot.slane %v1290, 2
    %v1292 = vmax.f32 %v1290, %v1291
    %v1293 = vrot.slane %v1292, 1
    %v1294 = vmax.f32 %v1292, %v1293
    %v1295 = vmax.f32 %v1197, %v1199
    %v1296 = vrot.slane %v1295, 4
    %v1297 = vmax.f32 %v1295, %v1296
    %v1298 = vrot.slane %v1297, 2
    %v1299 = vmax.f32 %v1297, %v1298
    %v1300 = vrot.slane %v1299, 1
    %v1301 = vmax.f32 %v1299, %v1300
    %v1302 = vmax.f32 %v1200, %v1202
    %v1303 = vrot.slane %v1302, 4
    %v1304 = vmax.f32 %v1302, %v1303
    %v1305 = vrot.slane %v1304, 2
    %v1306 = vmax.f32 %v1304, %v1305
    %v1307 = vrot.slane %v1306, 1
    %v1308 = vmax.f32 %v1306, %v1307
    %v1309 = vmax.f32 %v1201, %v1203
    %v1310 = vrot.slane %v1309, 4
    %v1311 = vmax.f32 %v1309, %v1310
    %v1312 = vrot.slane %v1311, 2
    %v1313 = vmax.f32 %v1311, %v1312
    %v1314 = vrot.slane %v1313, 1
    %v1315 = vmax.f32 %v1313, %v1314
    %vm1332 = vcmask 1041409
    %v1333 = vsel %vm1332, %v1224, %v1210
    %vm1334 = vcmask 1042434
    %v1335 = vsel %vm1334, %v1238, %v1333
    %vm1336 = vcmask 1043459
    %v1337 = vsel %vm1336, %v1252, %v1335
    %vm1338 = vcmask 1044484
    %v1339 = vsel %vm1338, %v1266, %v1337
    %vm1340 = vcmask 1045509
    %v1341 = vsel %vm1340, %v1280, %v1339
    %vm1342 = vcmask 1046534
    %v1343 = vsel %vm1342, %v1294, %v1341
    %vm1344 = vcmask 1047559
    %v1345 = vsel %vm1344, %v1308, %v1343
    %v1346 = vsel %vm1332, %v1231, %v1217
    %v1347 = vsel %vm1334, %v1245, %v1346
    %v1348 = vsel %vm1336, %v1259, %v1347
    %v1349 = vsel %vm1338, %v1273, %v1348
    %v1350 = vsel %vm1340, %v1287, %v1349
    %v1351 = vsel %vm1342, %v1301, %v1350
    %v1352 = vsel %vm1344, %v1315, %v1351
    %1355 = vst [vmem:[#allocation2] sm:$0xff] %v1345
    %1356 = vst [vmem:[#allocation2 + $0x8] sm:$0xff] %v1352
    // Predicated region
    $region42: #{texual_forward.1} parent=1 // pred_check
      _
    $region43: #{texual_forward.1} parent=1 // pred_check_branch
      %1358 = sbr.rel (0) target = $region45
    $region44: #{texual_forward.1} parent=1 // pred_region
      %s1360 = ssub.s32 256, 256
      %1361 = vsyncadd [#allocation3], %s1360
      %s1363 = sshll.u32 [#allocation2], 4
      %s1364 = int_to_ptr.vmem [resolvable:$true] %s1363
      %1366 = dma.vmem_to_hbm [thread:$0]  %s1364, 256, %s10, [#allocation3]
    $region45: #{texual_forward.1} parent=1 // pred_fallthru
      _
    // Predicated region
    $region46: #{texual_forward.1} parent=1 // pred_check
      _
    $region47: #{texual_forward.1} parent=1 // pred_check_branch
      %1368 = sbr.rel (0) target = $region49
    $region48: #{texual_forward.1} parent=1 // pred_region
      %1369 = dma.done [#allocation3], 256
    $region49: #{texual_forward.1} parent=1 // pred_fallthru
      _
    %1370 = vsyncpa [#allocation3], 1

</llo_original>
